<compile_context>
chip_gen: v5e
topology: v5e:2x2
jax: 0.10.0
libtpu: 0.0.40
codegen_flags: <defaults>
</compile_context>

<pallas_src>
import functools

import jax
import jax.numpy as jnp
from jax.experimental import pallas as pl
from jax.experimental.pallas import tpu as pltpu

_EPS = 0.001
_LANE = 128
_SUBLANE = 8
_DEFAULT_ROW_TILE = 2048  # (2048, 128) f32 = 1 MiB per input tile


def _silog_kernel(pred_ref, targ_ref, sum_ref, sq_ref, *, d_min, valid_rows,
                  row_tile):
    i = pl.program_id(0)

    pred = pred_ref[...].astype(jnp.float32)
    targ = targ_ref[...].astype(jnp.float32)

    # Mask out rows beyond the real array (garbage from Pallas block padding
    # on a partial last block), plus the depth-range mask of the reference.
    row_ids = jax.lax.broadcasted_iota(jnp.int32, (row_tile, _LANE), 0)
    in_bounds = (row_ids + i * row_tile) < valid_rows
    mask = jnp.logical_and(in_bounds,
                           jnp.logical_and(pred >= d_min, targ >= d_min))

    mp = jnp.where(mask, pred, 0.0)
    mt = jnp.where(mask, targ, 0.0)
    g = jnp.log(mp + _EPS) - jnp.log(mt + _EPS)  # masked -> g == 0 exactly

    # Reduce (row_tile, 128) -> (8, 128) by summing whole vregs (VPU only; the
    # reshape follows the native (8, 128) tiling so it is free).
    g3 = g.reshape(row_tile // _SUBLANE, _SUBLANE, _LANE)
    sum_ref[...] = jnp.sum(g3, axis=0)[None]
    sq_ref[...] = jnp.sum(g3 * g3, axis=0)[None]


def silog_loss(output, target, *, d_min, lamb=0.85,
               row_tile=_DEFAULT_ROW_TILE):
    """Matches SILogLoss.forward: sqrt(var(g) + (1 - lamb) * mean(g)**2)."""
    assert output.shape == target.shape
    n = int(output.size)

    flat_p = output.reshape(-1)
    flat_t = target.reshape(-1)

    # Pad (zeros) only when numel is not a whole number of (8, 128) vregs; the
    # common depth-map case (numel % 1024 == 0) is copy-free.  Padded elements
    # yield g == 0 and are excluded from N below.
    pad = (-n) % (_SUBLANE * _LANE)
    if pad:
        flat_p = jnp.concatenate([flat_p, jnp.zeros((pad,), flat_p.dtype)])
        flat_t = jnp.concatenate([flat_t, jnp.zeros((pad,), flat_t.dtype)])

    rows = flat_p.size // _LANE  # always a multiple of 8
    p2 = flat_p.reshape(rows, _LANE)
    t2 = flat_t.reshape(rows, _LANE)

    rt = min(int(row_tile), rows)
    rt -= rt % _SUBLANE
    rt = max(rt, _SUBLANE)
    num_blocks = pl.cdiv(rows, rt)

    kernel = functools.partial(_silog_kernel, d_min=float(d_min),
                               valid_rows=rows, row_tile=rt)

    bytes_in = 2 * n * output.dtype.itemsize
    cost = pl.CostEstimate(flops=12 * n, transcendentals=2 * n,
                           bytes_accessed=bytes_in + 2 * num_blocks * 8 * 128 * 4)

    part_sum, part_sq = pl.pallas_call(
        kernel,
        out_shape=(
            jax.ShapeDtypeStruct((num_blocks, _SUBLANE, _LANE), jnp.float32),
            jax.ShapeDtypeStruct((num_blocks, _SUBLANE, _LANE), jnp.float32),
        ),
        grid_spec=pltpu.PrefetchScalarGridSpec(
            num_scalar_prefetch=0,
            grid=(num_blocks,),
            in_specs=[
                pl.BlockSpec((rt, _LANE), lambda i: (i, 0)),
                pl.BlockSpec((rt, _LANE), lambda i: (i, 0)),
            ],
            out_specs=(
                pl.BlockSpec((1, _SUBLANE, _LANE), lambda i: (i, 0, 0)),
                pl.BlockSpec((1, _SUBLANE, _LANE), lambda i: (i, 0, 0)),
            ),
        ),
        compiler_params=pltpu.CompilerParams(
            dimension_semantics=("parallel",)),
        cost_estimate=cost,
    )(p2, t2)

    # Final tiny reduction + scalar glue in JAX.
    s = jnp.sum(part_sum)
    s2 = jnp.sum(part_sq)

    n_f = jnp.float32(n)
    mean = s / n_f
    # torch.var default: unbiased (divide by N-1).
    # TODO(synk): single-pass (s2 - N*mean^2) can lose precision when
    # |mean(g)| >> std(g) at very large N; switch to a shifted/Welford
    # accumulation if that regime matters.
    var = (s2 - n_f * mean * mean) / (n_f - 1.0)
    dg = var + (1.0 - lamb) * mean * mean
    return jnp.sqrt(dg)


def _silog_loss_ref(output, target, *, d_min, lamb=0.85):
    # Pure-JAX reference mirroring the PyTorch forward exactly.
    mask = jnp.logical_and(output >= d_min, target >= d_min)
    mp = (output * mask).reshape(output.shape[0], -1)
    mt = (target * mask).reshape(target.shape[0], -1)
    g = jnp.log(mp + _EPS) - jnp.log(mt + _EPS)
    var = jnp.var(g, ddof=1)
    dg = var + (1.0 - lamb) * jnp.mean(g) ** 2
    return jnp.sqrt(dg)


if __name__ == "__main__":
    key = jax.random.PRNGKey(0)
    m_cfg = {"depth_range": (0.1, 10.0)}
    lamb = 0.85
    d_min = m_cfg["depth_range"][0]

    # Main check: small NCHW depth maps, fully vreg-aligned (numel = 2048).
    k1, k2 = jax.random.split(key)
    output = jax.random.uniform(k1, (2, 4, 16, 16), jnp.float32, 0.0, 10.0)
    target = jax.random.uniform(k2, (2, 4, 16, 16), jnp.float32, 0.0, 10.0)

    loss = silog_loss(output, target, d_min=d_min, lamb=lamb)
    loss = jax.block_until_ready(loss)
    ref = _silog_loss_ref(output, target, d_min=d_min, lamb=lamb)
    assert jnp.allclose(loss, ref, rtol=1e-4, atol=1e-5), (loss, ref)

    # Second check: exercises the partial-last-block mask (rows=24, tile=16)
    # and a ragged element count (needs the zero-pad path).
    k3, k4 = jax.random.split(k1)
    out2 = jax.random.uniform(k3, (2, 3, 17, 19), jnp.float32, 0.0, 10.0)
    tgt2 = jax.random.uniform(k4, (2, 3, 17, 19), jnp.float32, 0.0, 10.0)
    loss2 = jax.block_until_ready(
        silog_loss(out2, tgt2, d_min=d_min, lamb=lamb, row_tile=16))
    ref2 = _silog_loss_ref(out2, tgt2, d_min=d_min, lamb=lamb)
    assert jnp.allclose(loss2, ref2, rtol=1e-4, atol=1e-5), (loss2, ref2)

    print("KERNEL_OK")
</pallas_src>

<mosaic_0001>
module attributes {stable_mosaic.version = 11 : i64} {
  func.func @_silog_kernel(%arg0: i32, %arg1: memref<16x128xf32, #tpu.memory_space<vmem>>, %arg2: memref<16x128xf32, #tpu.memory_space<vmem>>, %arg3: memref<1x8x128xf32, #tpu.memory_space<vmem>>, %arg4: memref<1x8x128xf32, #tpu.memory_space<vmem>>) attributes {dimension_semantics = [#tpu.dimension_semantics<parallel>], iteration_bounds = array<i64: 1>, scalar_prefetch = 0 : i64, scratch_operands = 0 : i64, tpu.core_type = #tpu.core_type<tc>, window_params = [{transform_indices = @transform_0, window_bounds = array<i64: 16, 128>}, {transform_indices = @transform_1, window_bounds = array<i64: 16, 128>}, {transform_indices = @transform_2, window_bounds = array<i64: 1, 8, 128>}, {transform_indices = @transform_3, window_bounds = array<i64: 1, 8, 128>}]} {
    %c0 = arith.constant 0 : index
    %c0_0 = arith.constant 0 : index
    %0 = vector.load %arg1[%c0, %c0_0] : memref<16x128xf32, #tpu.memory_space<vmem>>, vector<16x128xf32>
    %c0_1 = arith.constant 0 : index
    %c0_2 = arith.constant 0 : index
    %1 = vector.load %arg2[%c0_1, %c0_2] : memref<16x128xf32, #tpu.memory_space<vmem>>, vector<16x128xf32>
    %2 = tpu.iota {dimensions = array<i32: 0>} : vector<16x128xi32>
    %c16_i32 = arith.constant 16 : i32
    %3 = arith.muli %arg0, %c16_i32 : i32
    %4 = vector.broadcast %3 : i32 to vector<16x128xi32>
    %5 = arith.addi %2, %4 : vector<16x128xi32>
    %c16_i32_3 = arith.constant 16 : i32
    %6 = vector.broadcast %c16_i32_3 : i32 to vector<16x128xi32>
    %7 = arith.cmpi slt, %5, %6 : vector<16x128xi32>
    %cst = arith.constant 1.000000e-01 : f32
    %8 = vector.broadcast %cst : f32 to vector<16x128xf32>
    %9 = arith.cmpf oge, %0, %8 : vector<16x128xf32>
    %cst_4 = arith.constant 1.000000e-01 : f32
    %10 = vector.broadcast %cst_4 : f32 to vector<16x128xf32>
    %11 = arith.cmpf oge, %1, %10 : vector<16x128xf32>
    %12 = arith.andi %9, %11 : vector<16x128xi1>
    %13 = arith.andi %7, %12 : vector<16x128xi1>
    %cst_5 = arith.constant 0.000000e+00 : f32
    %14 = vector.broadcast %cst_5 : f32 to vector<16x128xf32>
    %15 = arith.select %13, %0, %14 : vector<16x128xi1>, vector<16x128xf32>
    %cst_6 = arith.constant 0.000000e+00 : f32
    %16 = vector.broadcast %cst_6 : f32 to vector<16x128xf32>
    %17 = arith.select %13, %1, %16 : vector<16x128xi1>, vector<16x128xf32>
    %cst_7 = arith.constant 1.000000e-03 : f32
    %18 = vector.broadcast %cst_7 : f32 to vector<16x128xf32>
    %19 = arith.addf %15, %18 : vector<16x128xf32>
    %20 = math.log %19 : vector<16x128xf32>
    %cst_8 = arith.constant 1.000000e-03 : f32
    %21 = vector.broadcast %cst_8 : f32 to vector<16x128xf32>
    %22 = arith.addf %17, %21 : vector<16x128xf32>
    %23 = math.log %22 : vector<16x128xf32>
    %24 = arith.subf %20, %23 : vector<16x128xf32>
    %25 = vector.shape_cast %24 : vector<16x128xf32> to vector<2x8x128xf32>
    %cst_9 = arith.constant dense<0.000000e+00> : vector<8x128xf32>
    %26 = vector.multi_reduction <add>, %25, %cst_9 [0] : vector<2x8x128xf32> to vector<8x128xf32>
    %27 = vector.shape_cast %26 : vector<8x128xf32> to vector<1x8x128xf32>
    %c0_10 = arith.constant 0 : index
    %c0_11 = arith.constant 0 : index
    %c0_12 = arith.constant 0 : index
    %28 = vector.load %arg3[%c0_10, %c0_11, %c0_12] : memref<1x8x128xf32, #tpu.memory_space<vmem>>, vector<1x8x128xf32>
    tpu.vector_store %arg3[%c0_10, %c0_11, %c0_12], %27 {strides = array<i32>} : memref<1x8x128xf32, #tpu.memory_space<vmem>>, vector<1x8x128xf32>,
    %29 = arith.mulf %25, %25 : vector<2x8x128xf32>
    %cst_13 = arith.constant dense<0.000000e+00> : vector<8x128xf32>
    %30 = vector.multi_reduction <add>, %29, %cst_13 [0] : vector<2x8x128xf32> to vector<8x128xf32>
    %31 = vector.shape_cast %30 : vector<8x128xf32> to vector<1x8x128xf32>
    %c0_14 = arith.constant 0 : index
    %c0_15 = arith.constant 0 : index
    %c0_16 = arith.constant 0 : index
    %32 = vector.load %arg4[%c0_14, %c0_15, %c0_16] : memref<1x8x128xf32, #tpu.memory_space<vmem>>, vector<1x8x128xf32>
    tpu.vector_store %arg4[%c0_14, %c0_15, %c0_16], %31 {strides = array<i32>} : memref<1x8x128xf32, #tpu.memory_space<vmem>>, vector<1x8x128xf32>,
    return
  }
  func.func @transform_0(%arg0: i32) -> (i32, i32) {
    %c0_i32 = arith.constant 0 : i32
    %c0_i32_0 = arith.constant 0 : i32
    return %arg0, %c0_i32 : i32, i32
  }
  func.func @transform_1(%arg0: i32) -> (i32, i32) {
    %c0_i32 = arith.constant 0 : i32
    %c0_i32_0 = arith.constant 0 : i32
    return %arg0, %c0_i32 : i32, i32
  }
  func.func @transform_2(%arg0: i32) -> (i32, i32, i32) {
    %c0_i32 = arith.constant 0 : i32
    %c0_i32_0 = arith.constant 0 : i32
    %c0_i32_1 = arith.constant 0 : i32
    return %arg0, %c0_i32, %c0_i32_0 : i32, i32, i32
  }
  func.func @transform_3(%arg0: i32) -> (i32, i32, i32) {
    %c0_i32 = arith.constant 0 : i32
    %c0_i32_0 = arith.constant 0 : i32
    %c0_i32_1 = arith.constant 0 : i32
    return %arg0, %c0_i32, %c0_i32_0 : i32, i32, i32
  }
}

</mosaic_0001>

<llo_original>
// kernel: tpu_custom_call.1
$region0: #{tpu_custom_call.1}
  #allocation0 [shape = 'u32[]', space=smem, size = 0x4, offset = 0x4, fixed_abs, tag = 'smem constant byte address 0x4 - core index']
  #allocation1 [shape = 'u32[72,128]{1,0:T(1,128)}', space=vmem, size = 0x9000, scoped, tag = 'internal scratch']
  %s0 = inlined_call_operand.hbm [shape: f32[16,128], index: 0, kind: input, shape index: {}]
  %s1 = inlined_call_operand.hbm [shape: f32[16,128], index: 1, kind: input, shape index: {}]
  %s2 = inlined_call_operand.hbm [shape: f32[1,8,128], index: 2, kind: output, shape index: {0}]
  %s3 = inlined_call_operand.hbm [shape: f32[1,8,128], index: 3, kind: output, shape index: {1}]
  %4 = xla_tuple %s2, %s3
  %s5 = sld [smem:[#allocation0]]
  $region34: #{tpu_custom_call.1} parent=0
    _
  %s7 = ssub.s32 1, %s5
  %s8 = scalar_select 0, %s7, %s5
  $region1: #{tpu_custom_call.1} parent=0
    #allocation2 [shape = 'u8[8192]{0}', space=vmem, size = 0x2000, scoped, tag = 'input window, operand 0, single buffered']
    #allocation3 [shape = 's32[1]{0}', space=sflag, size = 0x4, scoped, tag = 'scoped memory for tpu_custom_call.1']
    #allocation4 [shape = 's32[1]{0}', space=sflag, size = 0x4, scoped, tag = 'scoped memory for tpu_custom_call.1']
    #allocation5 [shape = 'u8[8192]{0}', space=vmem, size = 0x2000, scoped, tag = 'input window, operand 1, single buffered']
    #allocation6 [shape = 's32[1]{0}', space=sflag, size = 0x4, scoped, tag = 'scoped memory for tpu_custom_call.1']
    #allocation7 [shape = 'u8[4096]{0}', space=vmem, size = 0x1000, scoped, tag = 'output window, operand 0, single buffered']
    #allocation8 [shape = 'u8[4096]{0}', space=vmem, size = 0x1000, scoped, tag = 'output window, operand 1, single buffered']
    #allocation9 [shape = 's32[1]{0}', space=sflag, size = 0x4, scoped, tag = 'scoped memory for tpu_custom_call.1']
    %9 = vsyncpa [#allocation3], 0
    %10 = vsyncpa [#allocation6], 0
    %11 = vsyncpa [#allocation4], 0
    %12 = vsyncpa [#allocation9], 0
    // Predicated region
    $region2: #{tpu_custom_call.1} parent=1 // pred_check
      _
    $region3: #{tpu_custom_call.1} parent=1 // pred_check_branch
      %14 = sbr.rel (0) target = $region5
    $region4: #{tpu_custom_call.1} parent=1 // pred_region
      %16 = vsyncadd [#allocation3], 0
      %s17 = sshll.u32 %s0, 4
      %s18 = int_to_ptr.hbm [resolvable:$true] %s17
      %s19 = sshll.u32 [#allocation2], 4
      %s20 = int_to_ptr.vmem [resolvable:$true] %s19
      %25 = dma.hbm_to_vmem [thread:$0]  %s18, 256, %s20, [#allocation3], 128, 128, 8
    $region5: #{tpu_custom_call.1} parent=1 // pred_fallthru
      _
    // Predicated region
    $region6: #{tpu_custom_call.1} parent=1 // pred_check
      _
    $region7: #{tpu_custom_call.1} parent=1 // pred_check_branch
      %27 = sbr.rel (0) target = $region9
    $region8: #{tpu_custom_call.1} parent=1 // pred_region
      %29 = vsyncadd [#allocation6], 0
      %s30 = sshll.u32 %s1, 4
      %s31 = int_to_ptr.hbm [resolvable:$true] %s30
      %s32 = sshll.u32 [#allocation5], 4
      %s33 = int_to_ptr.vmem [resolvable:$true] %s32
      %38 = dma.hbm_to_vmem [thread:$0]  %s31, 256, %s33, [#allocation6], 128, 128, 8
    $region9: #{tpu_custom_call.1} parent=1 // pred_fallthru
      _
    // Predicated region
    $region10: #{tpu_custom_call.1} parent=1 // pred_check
      _
    $region11: #{tpu_custom_call.1} parent=1 // pred_check_branch
      %40 = sbr.rel (0) target = $region13
    $region12: #{tpu_custom_call.1} parent=1 // pred_region
      %42 = dma.done [#allocation3], 256
    $region13: #{tpu_custom_call.1} parent=1 // pred_fallthru
      _
    // Predicated region
    $region14: #{tpu_custom_call.1} parent=1 // pred_check
      _
    $region15: #{tpu_custom_call.1} parent=1 // pred_check_branch
      %44 = sbr.rel (0) target = $region17
    $region16: #{tpu_custom_call.1} parent=1 // pred_region
      %46 = dma.done [#allocation6], 256
    $region17: #{tpu_custom_call.1} parent=1 // pred_fallthru
      _
    %v47 = vld [vmem:[#allocation2] sm:$0xff]
    %v48 = vld [vmem:[#allocation2 + $0x8] sm:$0xff]
    %v49 = vld [vmem:[#allocation5] sm:$0xff]
    %v50 = vld [vmem:[#allocation5 + $0x8] sm:$0xff]
    %v51 = vlaneseq
    %v52 = vshrl.u32 %v51, 7
    %v53 = vadd.s32 %v52, 8
    %s54 = smul.u32 0, 16
    %v55 = vstv %s54
    %v56 = vadd.s32 %v52, %v55
    %v57 = vadd.s32 %v53, %v55
    %vm58 = vcmp.lt.s32.totalorder %v56, 16
    %vm59 = vcmp.lt.s32.totalorder %v57, 16
    %vm60 = vcmp.ge.f32.partialorder %v47, 0.1
    %vm61 = vcmp.ge.f32.partialorder %v48, 0.1
    %vm62 = vcmp.ge.f32.partialorder %v49, 0.1
    %vm63 = vcmp.ge.f32.partialorder %v50, 0.1
    %vm64 = vmand %vm60, %vm62
    %vm65 = vmand %vm61, %vm63
    %vm66 = vmand %vm58, %vm64
    %vm67 = vmand %vm59, %vm65
    %v68 = vsel %vm66, %v47, 0.0
    %v69 = vsel %vm67, %v48, 0.0
    %v70 = vsel %vm66, %v49, 0.0
    %v71 = vsel %vm67, %v50, 0.0
    %v72 = vadd.f32 %v68, 0.001
    %v73 = vadd.f32 %v69, 0.001
    %v74 = vlog2.pop %v72
    %v75 = vmul.f32 %v74, 0.6931472
    %v76 = vlog2.pop %v73
    %v77 = vmul.f32 %v76, 0.6931472
    %v78 = vadd.f32 %v70, 0.001
    %v79 = vadd.f32 %v71, 0.001
    %v80 = vlog2.pop %v78
    %v81 = vmul.f32 %v80, 0.6931472
    %v82 = vlog2.pop %v79
    %v83 = vmul.f32 %v82, 0.6931472
    %v84 = vsub.f32 %v75, %v81
    %v85 = vsub.f32 %v77, %v83
    %v86 = vadd.f32 %v84, %v85
    %87 = vst [vmem:[#allocation7] sm:$0xff] %v86
    %v88 = vmul.f32 %v84, %v84
    %v89 = vmul.f32 %v85, %v85
    %v90 = vadd.f32 %v88, %v89
    %91 = vst [vmem:[#allocation8] sm:$0xff] %v90
    // Predicated region
    $region18: #{tpu_custom_call.1} parent=1 // pred_check
      _
    $region19: #{tpu_custom_call.1} parent=1 // pred_check_branch
      %93 = sbr.rel (0) target = $region21
    $region20: #{tpu_custom_call.1} parent=1 // pred_region
      %95 = vsyncadd [#allocation4], 0
      %s97 = sshll.u32 [#allocation7], 4
      %s98 = int_to_ptr.vmem [resolvable:$true] %s97
      %s99 = sshll.u32 %s2, 4
      %s100 = int_to_ptr.hbm [resolvable:$true] %s99
      %102 = dma.vmem_to_hbm [thread:$0]  %s98, 128, %s100, [#allocation4]
    $region21: #{tpu_custom_call.1} parent=1 // pred_fallthru
      _
    // Predicated region
    $region22: #{tpu_custom_call.1} parent=1 // pred_check
      _
    $region23: #{tpu_custom_call.1} parent=1 // pred_check_branch
      %104 = sbr.rel (0) target = $region25
    $region24: #{tpu_custom_call.1} parent=1 // pred_region
      %106 = vsyncadd [#allocation9], 0
      %s108 = sshll.u32 [#allocation8], 4
      %s109 = int_to_ptr.vmem [resolvable:$true] %s108
      %s110 = sshll.u32 %s3, 4
      %s111 = int_to_ptr.hbm [resolvable:$true] %s110
      %113 = dma.vmem_to_hbm [thread:$0]  %s109, 128, %s111, [#allocation9]
    $region25: #{tpu_custom_call.1} parent=1 // pred_fallthru
      _
    // Predicated region
    $region26: #{tpu_custom_call.1} parent=1 // pred_check
      _
    $region27: #{tpu_custom_call.1} parent=1 // pred_check_branch
      %115 = sbr.rel (0) target = $region29
    $region28: #{tpu_custom_call.1} parent=1 // pred_region
      %117 = dma.done [#allocation4], 128
    $region29: #{tpu_custom_call.1} parent=1 // pred_fallthru
      _
    // Predicated region
    $region30: #{tpu_custom_call.1} parent=1 // pred_check
      _
    $region31: #{tpu_custom_call.1} parent=1 // pred_check_branch
      %119 = sbr.rel (0) target = $region33
    $region32: #{tpu_custom_call.1} parent=1 // pred_region
      %121 = dma.done [#allocation9], 128
    $region33: #{tpu_custom_call.1} parent=1 // pred_fallthru
      _
    %122 = vsyncpa [#allocation3], 1
    %123 = vsyncpa [#allocation6], 1
    %124 = vsyncpa [#allocation4], 1
    %125 = vsyncpa [#allocation9], 1

</llo_original>
